<compile_context>
chip_gen: v7x
topology: tpu7x:2x2x1
jax: 0.10.0
libtpu: 0.0.40
codegen_flags: <defaults>
</compile_context>

<pallas_src>
import functools

import numpy as np
import jax
import jax.numpy as jnp
from jax import lax
from jax.experimental import pallas as pl
from jax.experimental.pallas import tpu as pltpu

LANE = 128


def _round_up(x, m):
    return (x + m - 1) // m * m


# ---------------------------------------------------------------------------
# Pallas kernel: whole encoder hot path fused in one VMEM-resident kernel.
#   x_ref     [N, input_dim]
#   adj_ref   [N, N]
#   w0_ref    [input_dim, hidden1]
#   w12_ref   [hidden1, PAD]   (= [W1 | W2 | zeros], PAD multiple of 128)
#   noise_ref [N, PAD]         (= [noise | zeros])
#   ml_ref    [N, PAD]  out    (= [mean | logstd | zeros])
#   z_ref     [N, PAD]  out    (cols [0, hidden2) hold sampled Z)
# ---------------------------------------------------------------------------
def encoder_kernel(x_ref, adj_ref, w0_ref, w12_ref, noise_ref,
                   ml_ref, z_ref, *, hidden2):
    x = x_ref[...]
    adj = adj_ref[...]

    # base_gcn: relu(adj @ (X @ W0))   (same associativity as torch.mm order)
    h = jnp.dot(x, w0_ref[...], preferred_element_type=jnp.float32)
    h = jnp.maximum(jnp.dot(adj, h, preferred_element_type=jnp.float32), 0.0)

    # fused gcn_mean + gcn_logstddev: adj @ (h @ [W1 | W2 | 0])
    ml = jnp.dot(h, w12_ref[...], preferred_element_type=jnp.float32)
    ml = jnp.dot(adj, ml, preferred_element_type=jnp.float32)
    ml_ref[...] = ml                                   # lane-dense store

    # reparameterization: Z = noise * exp(logstd / 2) + mean
    # Extract the logstd column (lane index == hidden2) via a masked
    # lane-reduction (XLU slot) -> [N, 1]; exp on the narrow column (EUP).
    col = lax.broadcasted_iota(jnp.int32, ml.shape, 1)
    logstd = jnp.sum(jnp.where(col == hidden2, ml, 0.0), axis=1, keepdims=True)
    e = jnp.exp(logstd * 0.5)
    e = jnp.broadcast_to(e, ml.shape)                  # single explicit broadcast
    # padded cols (>= hidden2) hold 0*e + 0 = 0; wrapper slices them off anyway.
    z_ref[...] = noise_ref[...] * e + ml


def encoder_forward(X, adj, W0, W1, W2, noise):
    N, input_dim = X.shape
    hidden1 = W0.shape[1]
    hidden2 = W1.shape[1]
    pad_w = _round_up(hidden2 + 1, LANE)               # lane-dense output width

    # Fuse mean/logstd weights into one zero-padded slab; pad noise to match.
    W12 = jnp.concatenate([W1, W2], axis=1)                        # [h1, h2+1]
    W12 = jnp.pad(W12, ((0, 0), (0, pad_w - (hidden2 + 1))))       # [h1, pad_w]
    noise_p = jnp.pad(noise, ((0, 0), (0, pad_w - hidden2)))       # [N, pad_w]

    def full_spec(arr):
        ndim = arr.ndim
        return pl.BlockSpec(arr.shape, lambda *_: (0,) * ndim)

    out_shapes = (
        jax.ShapeDtypeStruct((N, pad_w), jnp.float32),   # [mean | logstd | 0]
        jax.ShapeDtypeStruct((N, pad_w), jnp.float32),   # [Z | pad]
    )
    out_specs = (
        pl.BlockSpec((N, pad_w), lambda: (0, 0)),
        pl.BlockSpec((N, pad_w), lambda: (0, 0)),
    )

    # Right-size VMEM: ~4x the resident working set (inputs + outputs +
    # intermediates), floored at 4 MiB — well under the 32 MiB default scoped
    # limit and v7x's 64 MiB physical VMEM.
    itemsize = 4
    working_bytes = itemsize * (
        X.size + adj.size + W0.size + W12.size + noise_p.size   # inputs
        + 2 * N * pad_w                                         # outputs
        + N * hidden1 + N * pad_w                               # intermediates
    )
    vmem_limit = int(max(4 << 20, _round_up(4 * working_bytes, 1 << 20)))

    flops = 2 * (N * input_dim * hidden1 + N * N * hidden1
                 + N * hidden1 * pad_w + N * N * pad_w) + 3 * N * pad_w
    bytes_accessed = itemsize * (X.size + adj.size + W0.size + W12.size
                                 + noise_p.size + 2 * N * pad_w)

    kern = functools.partial(encoder_kernel, hidden2=hidden2)

    ml, z_p = pl.pallas_call(
        kern,
        out_shape=out_shapes,
        in_specs=[full_spec(a) for a in (X, adj, W0, W12, noise_p)],
        out_specs=out_specs,
        compiler_params=pltpu.CompilerParams(vmem_limit_bytes=vmem_limit),
        cost_estimate=pl.CostEstimate(
            flops=int(flops),
            transcendentals=int(N),
            bytes_accessed=int(bytes_accessed)),
    )(X, adj, W0, W12, noise_p)

    mean = ml[:, :hidden2]
    logstd = ml[:, hidden2:hidden2 + 1]
    z = z_p[:, :hidden2]
    return mean, logstd, z


# ---------------------------------------------------------------------------
# Deterministic parameter init (mirrors glorot_init: uniform(-r, r),
# r = sqrt(6 / (in + out))) and a pure-JAX reference for sanity checking.
# ---------------------------------------------------------------------------
def glorot_init(key, input_dim, output_dim):
    r = np.sqrt(6.0 / (input_dim + output_dim))
    u = jax.random.uniform(key, (input_dim, output_dim), dtype=jnp.float32)
    return u * 2.0 * r - r


def encoder_ref(X, adj, W0, W1, W2, noise):
    h = jnp.maximum(adj @ (X @ W0), 0.0)
    mean = adj @ (h @ W1)
    logstd = adj @ (h @ W2)
    z = noise * jnp.exp(logstd / 2.0) + mean
    return mean, logstd, z


if __name__ == "__main__":
    key = jax.random.PRNGKey(0)
    k_x, k_adj, k_w0, k_w1, k_w2, k_noise = jax.random.split(key, 6)

    # small shapes consistent with the module: N nodes, feature dims
    N = 64          # number of nodes (X.size(0))
    input_dim = 32  # args.input_dim
    hidden1 = 32    # args.hidden1_dim
    hidden2 = 16    # args.hidden2_dim

    X = jax.random.normal(k_x, (N, input_dim), dtype=jnp.float32)

    # dense symmetric-normalized adjacency (synthetic)
    A = (jax.random.uniform(k_adj, (N, N)) > 0.8).astype(jnp.float32)
    A = jnp.maximum(A, A.T) + jnp.eye(N, dtype=jnp.float32)
    deg = jnp.sum(A, axis=1)
    d_inv_sqrt = 1.0 / jnp.sqrt(deg)
    adj_norm = A * d_inv_sqrt[:, None] * d_inv_sqrt[None, :]

    W0 = glorot_init(k_w0, input_dim, hidden1)
    W1 = glorot_init(k_w1, hidden1, hidden2)
    W2 = glorot_init(k_w2, hidden1, 1)

    # gaussian_noise = torch.randn(X.size(0), hidden2) — fixed here for determinism
    noise = jax.random.normal(k_noise, (N, hidden2), dtype=jnp.float32)

    mean, logstd, z = jax.block_until_ready(
        encoder_forward(X, adj_norm, W0, W1, W2, noise)
    )

    mean_r, logstd_r, z_r = encoder_ref(X, adj_norm, W0, W1, W2, noise)
    np.testing.assert_allclose(np.asarray(mean), np.asarray(mean_r), rtol=1e-5, atol=1e-5)
    np.testing.assert_allclose(np.asarray(logstd), np.asarray(logstd_r), rtol=1e-5, atol=1e-5)
    np.testing.assert_allclose(np.asarray(z), np.asarray(z_r), rtol=1e-5, atol=1e-5)

    print("KERNEL_OK")
</pallas_src>

<mosaic_0001>
module attributes {stable_mosaic.version = 11 : i64} {
  func.func @encoder_kernel(%arg0: memref<64x32xf32, #tpu.memory_space<vmem>>, %arg1: memref<64x64xf32, #tpu.memory_space<vmem>>, %arg2: memref<32x32xf32, #tpu.memory_space<vmem>>, %arg3: memref<32x128xf32, #tpu.memory_space<vmem>>, %arg4: memref<64x128xf32, #tpu.memory_space<vmem>>, %arg5: memref<64x128xf32, #tpu.memory_space<vmem>>, %arg6: memref<64x128xf32, #tpu.memory_space<vmem>>) attributes {dimension_semantics = [], scalar_prefetch = 0 : i64, scratch_operands = 0 : i64, tpu.core_type = #tpu.core_type<tc>} {
    %c0 = arith.constant 0 : index
    %c0_0 = arith.constant 0 : index
    %0 = vector.load %arg0[%c0, %c0_0] : memref<64x32xf32, #tpu.memory_space<vmem>>, vector<64x32xf32>
    %c0_1 = arith.constant 0 : index
    %c0_2 = arith.constant 0 : index
    %1 = vector.load %arg1[%c0_1, %c0_2] : memref<64x64xf32, #tpu.memory_space<vmem>>, vector<64x64xf32>
    %c0_3 = arith.constant 0 : index
    %c0_4 = arith.constant 0 : index
    %2 = vector.load %arg2[%c0_3, %c0_4] : memref<32x32xf32, #tpu.memory_space<vmem>>, vector<32x32xf32>
    %cst = arith.constant dense<0.000000e+00> : vector<64x32xf32>
    %3 = tpu.matmul %0, %2, %cst {dimension_numbers = #tpu.dot_dimension_numbers<[1], [0], [0], [1], [0, 0, 1, 1], [], []>} : vector<64x32xf32>, vector<32x32xf32>, vector<64x32xf32> -> vector<64x32xf32>
    %cst_5 = arith.constant dense<0.000000e+00> : vector<64x32xf32>
    %4 = tpu.matmul %1, %3, %cst_5 {dimension_numbers = #tpu.dot_dimension_numbers<[1], [0], [0], [1], [0, 0, 1, 1], [], []>} : vector<64x64xf32>, vector<64x32xf32>, vector<64x32xf32> -> vector<64x32xf32>
    %cst_6 = arith.constant 0.000000e+00 : f32
    %5 = vector.broadcast %cst_6 : f32 to vector<64x32xf32>
    %6 = arith.maximumf %4, %5 : vector<64x32xf32>
    %c0_7 = arith.constant 0 : index
    %c0_8 = arith.constant 0 : index
    %7 = vector.load %arg3[%c0_7, %c0_8] : memref<32x128xf32, #tpu.memory_space<vmem>>, vector<32x128xf32>
    %cst_9 = arith.constant dense<0.000000e+00> : vector<64x128xf32>
    %8 = tpu.matmul %6, %7, %cst_9 {dimension_numbers = #tpu.dot_dimension_numbers<[1], [0], [0], [1], [0, 0, 1, 1], [], []>} : vector<64x32xf32>, vector<32x128xf32>, vector<64x128xf32> -> vector<64x128xf32>
    %cst_10 = arith.constant dense<0.000000e+00> : vector<64x128xf32>
    %9 = tpu.matmul %1, %8, %cst_10 {dimension_numbers = #tpu.dot_dimension_numbers<[1], [0], [0], [1], [0, 0, 1, 1], [], []>} : vector<64x64xf32>, vector<64x128xf32>, vector<64x128xf32> -> vector<64x128xf32>
    %c0_11 = arith.constant 0 : index
    %c0_12 = arith.constant 0 : index
    %10 = vector.load %arg5[%c0_11, %c0_12] : memref<64x128xf32, #tpu.memory_space<vmem>>, vector<64x128xf32>
    tpu.vector_store %arg5[%c0_11, %c0_12], %9 {strides = array<i32>} : memref<64x128xf32, #tpu.memory_space<vmem>>, vector<64x128xf32>,
    %11 = tpu.iota {dimensions = array<i32: 1>} : vector<64x128xi32>
    %c16_i32 = arith.constant 16 : i32
    %12 = vector.broadcast %c16_i32 : i32 to vector<64x128xi32>
    %13 = arith.cmpi eq, %11, %12 : vector<64x128xi32>
    %cst_13 = arith.constant 0.000000e+00 : f32
    %14 = vector.broadcast %cst_13 : f32 to vector<64x128xf32>
    %15 = arith.select %13, %9, %14 : vector<64x128xi1>, vector<64x128xf32>
    %cst_14 = arith.constant dense<0.000000e+00> : vector<64xf32>
    %16 = vector.multi_reduction <add>, %15, %cst_14 [1] : vector<64x128xf32> to vector<64xf32>
    %17 = vector.shape_cast %16 : vector<64xf32> to vector<64x1xf32>
    %cst_15 = arith.constant 5.000000e-01 : f32
    %18 = vector.broadcast %cst_15 : f32 to vector<64x1xf32>
    %19 = arith.mulf %17, %18 : vector<64x1xf32>
    %20 = math.exp %19 : vector<64x1xf32>
    %21 = vector.shape_cast %20 : vector<64x1xf32> to vector<64x1xf32>
    %22 = vector.broadcast %21 : vector<64x1xf32> to vector<64x128xf32>
    %c0_16 = arith.constant 0 : index
    %c0_17 = arith.constant 0 : index
    %23 = vector.load %arg4[%c0_16, %c0_17] : memref<64x128xf32, #tpu.memory_space<vmem>>, vector<64x128xf32>
    %24 = arith.mulf %23, %22 : vector<64x128xf32>
    %25 = arith.addf %24, %9 : vector<64x128xf32>
    %c0_18 = arith.constant 0 : index
    %c0_19 = arith.constant 0 : index
    %26 = vector.load %arg6[%c0_18, %c0_19] : memref<64x128xf32, #tpu.memory_space<vmem>>, vector<64x128xf32>
    tpu.vector_store %arg6[%c0_18, %c0_19], %25 {strides = array<i32>} : memref<64x128xf32, #tpu.memory_space<vmem>>, vector<64x128xf32>,
    return
  }
}

</mosaic_0001>

<llo_original>
// kernel: tpu_custom_call.1
$region0: #{tpu_custom_call.1}
  #allocation0 [shape = 'u32[]', space=smem, size = 0x4, offset = 0x4, fixed_abs, tag = 'smem constant byte address 0x4 - core index']
  #allocation1 [shape = 'u32[144,128]{1,0:T(1,128)}', space=vmem, size = 0x12000, scoped, tag = 'internal scratch']
  %s0 = inlined_call_operand.vmem [shape: f32[64,32], index: 0, kind: input, shape index: {}]
  %s1 = inlined_call_operand.vmem [shape: f32[64,64], index: 1, kind: input, shape index: {}]
  %s2 = inlined_call_operand.vmem [shape: f32[32,32], index: 2, kind: input, shape index: {}]
  %s3 = inlined_call_operand.hbm [shape: f32[32,128], index: 3, kind: input, shape index: {}]
  %s4 = inlined_call_operand.hbm [shape: f32[64,128], index: 4, kind: input, shape index: {}]
  %s5 = inlined_call_operand.hbm [shape: f32[64,128], index: 5, kind: output, shape index: {0}]
  %s6 = inlined_call_operand.hbm [shape: f32[64,128], index: 6, kind: output, shape index: {1}]
  %7 = xla_tuple %s5, %s6
  %s8 = sld [smem:[#allocation0]]
  $region46: #{tpu_custom_call.1} parent=0
    _
  %s10 = ssub.s32 1, %s8
  %s11 = scalar_select 0, %s10, %s8
  $region1: #{tpu_custom_call.1} parent=0
    #allocation2 [shape = 'u8[16384]{0}', space=vmem, size = 0x4000, scoped, tag = 'input window, operand 3, single buffered']
    #allocation3 [shape = 's32[1]{0}', space=sflag, size = 0x4, scoped, tag = 'scoped memory for tpu_custom_call.1']
    #allocation4 [shape = 's32[1]{0}', space=sflag, size = 0x4, scoped, tag = 'scoped memory for tpu_custom_call.1']
    #allocation5 [shape = 'u8[32768]{0}', space=vmem, size = 0x8000, scoped, tag = 'input window, operand 4, single buffered']
    #allocation6 [shape = 's32[1]{0}', space=sflag, size = 0x4, scoped, tag = 'scoped memory for tpu_custom_call.1']
    #allocation7 [shape = 'u8[32768]{0}', space=vmem, size = 0x8000, scoped, tag = 'output window, operand 0, single buffered']
    #allocation8 [shape = 'u8[32768]{0}', space=vmem, size = 0x8000, scoped, tag = 'output window, operand 1, single buffered']
    #allocation9 [shape = 's32[1]{0}', space=sflag, size = 0x4, scoped, tag = 'scoped memory for tpu_custom_call.1']
    %12 = vsyncpa [#allocation3], 0
    %13 = vsyncpa [#allocation6], 0
    %14 = vsyncpa [#allocation4], 0
    %15 = vsyncpa [#allocation9], 0
    // Predicated region
    $region2: #{tpu_custom_call.1} parent=1 // pred_check
      _
    $region3: #{tpu_custom_call.1} parent=1 // pred_check_branch
      %17 = sbr.rel (0) target = $region5
    $region4: #{tpu_custom_call.1} parent=1 // pred_region
      _
    $region5: #{tpu_custom_call.1} parent=1 // pred_fallthru
      _
    // Predicated region
    $region6: #{tpu_custom_call.1} parent=1 // pred_check
      _
    $region7: #{tpu_custom_call.1} parent=1 // pred_check_branch
      %19 = sbr.rel (0) target = $region9
    $region8: #{tpu_custom_call.1} parent=1 // pred_region
      _
    $region9: #{tpu_custom_call.1} parent=1 // pred_fallthru
      _
    // Predicated region
    $region10: #{tpu_custom_call.1} parent=1 // pred_check
      _
    $region11: #{tpu_custom_call.1} parent=1 // pred_check_branch
      %21 = sbr.rel (0) target = $region13
    $region12: #{tpu_custom_call.1} parent=1 // pred_region
      _
    $region13: #{tpu_custom_call.1} parent=1 // pred_fallthru
      _
    // Predicated region
    $region14: #{tpu_custom_call.1} parent=1 // pred_check
      _
    $region15: #{tpu_custom_call.1} parent=1 // pred_check_branch
      %23 = sbr.rel (0) target = $region17
    $region16: #{tpu_custom_call.1} parent=1 // pred_region
      %s25 = ssub.s32 512, 512
      %26 = vsyncadd [#allocation3], %s25
      %s27 = sshll.u32 [#allocation2], 4
      %s28 = int_to_ptr.vmem [resolvable:$true] %s27
      %33 = dma.hbm_to_vmem [thread:$0]  %s3, 512, %s28, [#allocation3], 128, 128, 8
    $region17: #{tpu_custom_call.1} parent=1 // pred_fallthru
      _
    // Predicated region
    $region18: #{tpu_custom_call.1} parent=1 // pred_check
      _
    $region19: #{tpu_custom_call.1} parent=1 // pred_check_branch
      %35 = sbr.rel (0) target = $region21
    $region20: #{tpu_custom_call.1} parent=1 // pred_region
      %s37 = ssub.s32 1024, 1024
      %38 = vsyncadd [#allocation6], %s37
      %s39 = sshll.u32 [#allocation5], 4
      %s40 = int_to_ptr.vmem [resolvable:$true] %s39
      %45 = dma.hbm_to_vmem [thread:$0]  %s4, 1024, %s40, [#allocation6], 128, 128, 8
    $region21: #{tpu_custom_call.1} parent=1 // pred_fallthru
      _
    // Predicated region
    $region22: #{tpu_custom_call.1} parent=1 // pred_check
      _
    $region23: #{tpu_custom_call.1} parent=1 // pred_check_branch
      %47 = sbr.rel (0) target = $region25
    $region24: #{tpu_custom_call.1} parent=1 // pred_region
      %48 = dma.done [#allocation3], 512
    $region25: #{tpu_custom_call.1} parent=1 // pred_fallthru
      _
    // Predicated region
    $region26: #{tpu_custom_call.1} parent=1 // pred_check
      _
    $region27: #{tpu_custom_call.1} parent=1 // pred_check_branch
      %50 = sbr.rel (0) target = $region29
    $region28: #{tpu_custom_call.1} parent=1 // pred_region
      %51 = dma.done [#allocation6], 1024
    $region29: #{tpu_custom_call.1} parent=1 // pred_fallthru
      _
    %v52 = vld [vmem:[%s0] sm:$0xff]
    %v53 = vld [vmem:[%s0 + $0x8] sm:$0xff]
    %v54 = vld [vmem:[%s0 + $0x10] sm:$0xff]
    %v55 = vld [vmem:[%s0 + $0x18] sm:$0xff]
    %v56 = vld [vmem:[%s0 + $0x20] sm:$0xff]
    %v57 = vld [vmem:[%s0 + $0x28] sm:$0xff]
    %v58 = vld [vmem:[%s0 + $0x30] sm:$0xff]
    %v59 = vld [vmem:[%s0 + $0x38] sm:$0xff]
    %v60 = vld [vmem:[%s1] sm:$0xff]
    %v61 = vld [vmem:[%s1 + $0x8] sm:$0xff]
    %v62 = vld [vmem:[%s1 + $0x10] sm:$0xff]
    %v63 = vld [vmem:[%s1 + $0x18] sm:$0xff]
    %v64 = vld [vmem:[%s1 + $0x20] sm:$0xff]
    %v65 = vld [vmem:[%s1 + $0x28] sm:$0xff]
    %v66 = vld [vmem:[%s1 + $0x30] sm:$0xff]
    %v67 = vld [vmem:[%s1 + $0x38] sm:$0xff]
    %v68 = vld [vmem:[%s2] sm:$0xff]
    %v69 = vld [vmem:[%s2 + $0x8] sm:$0xff]
    %v70 = vld [vmem:[%s2 + $0x10] sm:$0xff]
    %v71 = vld [vmem:[%s2 + $0x18] sm:$0xff]
    %vm72 = vcmask 261120
    %v74 = vsel %vm72, %v52, 0
    %v77 = vsel %vm72, %v53, 0
    %v80 = vsel %vm72, %v54, 0
    %v83 = vsel %vm72, %v55, 0
    %v86 = vsel %vm72, %v56, 0
    %v89 = vsel %vm72, %v57, 0
    %v92 = vsel %vm72, %v58, 0
    %v95 = vsel %vm72, %v59, 0
    %97 = vmatprep.subr.mxu0 0.0
    %98 = vmatpush1.msra.mxu0 %v68
    %99 = vmatprep.subr.mxu0 0.0
    %100 = vmatpush1.msra.mxu0 %v69
    %101 = vmatprep.subr.mxu0 0.0
    %102 = vmatpush1.msra.mxu0 %v70
    %103 = vmatprep.subr.mxu0 0.0
    %104 = vmatpush1.msra.mxu0 %v71
    %105 = vmatprep.subr.mxu0 0.0
    %106 = vmatpush1.msra.mxu0 0.0
    %107 = vmatprep.subr.mxu0 0.0
    %108 = vmatpush1.msra.mxu0 0.0
    %109 = vmatprep.subr.mxu0 0.0
    %110 = vmatpush1.msra.mxu0 0.0
    %111 = vmatprep.subr.mxu0 0.0
    %112 = vmatpush1.msra.mxu0 0.0
    %113 = vmatprep.subr.mxu0 0.0
    %114 = vmatpush1.msra.mxu0 0.0
    %115 = vmatprep.subr.mxu0 0.0
    %116 = vmatpush1.msra.mxu0 0.0
    %117 = vmatprep.subr.mxu0 0.0
    %118 = vmatpush1.msra.mxu0 0.0
    %119 = vmatprep.subr.mxu0 0.0
    %120 = vmatpush1.msra.mxu0 0.0
    %121 = vmatprep.subr.mxu0 0.0
    %122 = vmatpush1.msra.mxu0 0.0
    %123 = vmatprep.subr.mxu0 0.0
    %124 = vmatpush1.msra.mxu0 0.0
    %125 = vmatprep.subr.mxu0 0.0
    %126 = vmatpush1.msra.mxu0 0.0
    %127 = vmatprep.subr.mxu0 0.0
    %128 = vmatpush1.msra.mxu0 0.0
    %129 = vmatprep.subr.mxu0 0.0
    %130 = vmatpush1.msra.mxu0 0.0
    %131 = vmatprep.subr.mxu0 0.0
    %132 = vmatpush1.msra.mxu0 0.0
    %133 = vmatprep.subr.mxu0 0.0
    %134 = vmatpush1.msra.mxu0 0.0
    %135 = vmatprep.subr.mxu0 0.0
    %136 = vmatpush1.msra.mxu0 0.0
    %137 = vmatprep.subr.mxu0 0.0
    %138 = vmatpush1.msra.mxu0 0.0
    %139 = vmatprep.subr.mxu0 0.0
    %140 = vmatpush1.msra.mxu0 0.0
    %141 = vmatprep.subr.mxu0 0.0
    %142 = vmatpush1.msra.mxu0 0.0
    %143 = vmatprep.subr.mxu0 0.0
    %144 = vmatpush1.msra.mxu0 0.0
    %145 = vmatprep.subr.mxu0 0.0
    %146 = vmatpush1.msra.mxu0 0.0
    %147 = vmatprep.subr.mxu0 0.0
    %148 = vmatpush1.msra.mxu0 0.0
    %149 = vmatprep.subr.mxu0 0.0
    %150 = vmatpush1.msra.mxu0 0.0
    %151 = vmatprep.subr.mxu0 0.0
    %152 = vmatpush1.msra.mxu0 0.0
    %153 = vmatprep.subr.mxu0 0.0
    %154 = vmatpush1.msra.mxu0 0.0
    %155 = vmatprep.subr.mxu0 0.0
    %156 = vmatpush1.msra.mxu0 0.0
    %157 = vmatprep.subr.mxu0 0.0
    %158 = vmatpush1.msra.mxu0 0.0
    %159 = vmatprep.subr.mxu0 0.0
    %160 = vmatpush1.msra.mxu0 0.0
    %161 = vmatprep.mubr.f32.mxu0 0.0
    %162 = vmatmul.mubr.f32.gmra.mrb[0].mxu0 %v74
    %v163 = vpop.f32.mrb[0].mxu0
    %v164 = vadd.f32 0.0, %v163
    %v165 = vpop.f32.mrb[0].mxu0
    %166 = vmatprep.mubr.f32.mxu0 0.0
    %167 = vmatmul.mubr.f32.gmra.mrb[0].mxu0 %v77
    %v168 = vpop.f32.mrb[0].mxu0
    %v169 = vadd.f32 0.0, %v168
    %v170 = vpop.f32.mrb[0].mxu0
    %171 = vmatprep.mubr.f32.mxu0 0.0
    %172 = vmatmul.mubr.f32.gmra.mrb[0].mxu0 %v80
    %v173 = vpop.f32.mrb[0].mxu0
    %v174 = vadd.f32 0.0, %v173
    %v175 = vpop.f32.mrb[0].mxu0
    %176 = vmatprep.mubr.f32.mxu0 0.0
    %177 = vmatmul.mubr.f32.gmra.mrb[0].mxu0 %v83
    %v178 = vpop.f32.mrb[0].mxu0
    %v179 = vadd.f32 0.0, %v178
    %v180 = vpop.f32.mrb[0].mxu0
    %181 = vmatprep.mubr.f32.mxu0 0.0
    %182 = vmatmul.mubr.f32.gmra.mrb[0].mxu0 %v86
    %v183 = vpop.f32.mrb[0].mxu0
    %v184 = vadd.f32 0.0, %v183
    %v185 = vpop.f32.mrb[0].mxu0
    %186 = vmatprep.mubr.f32.mxu0 0.0
    %187 = vmatmul.mubr.f32.gmra.mrb[0].mxu0 %v89
    %v188 = vpop.f32.mrb[0].mxu0
    %v189 = vadd.f32 0.0, %v188
    %v190 = vpop.f32.mrb[0].mxu0
    %191 = vmatprep.mubr.f32.mxu0 0.0
    %192 = vmatmul.mubr.f32.gmra.mrb[0].mxu0 %v92
    %v193 = vpop.f32.mrb[0].mxu0
    %v194 = vadd.f32 0.0, %v193
    %v195 = vpop.f32.mrb[0].mxu0
    %196 = vmatprep.mubr.f32.mxu0 0.0
    %197 = vmatmul.mubr.f32.gmra.mrb[0].mxu0 %v95
    %v198 = vpop.f32.mrb[0].mxu0
    %v199 = vadd.f32 0.0, %v198
    %v200 = vpop.f32.mrb[0].mxu0
    %201 = vdwg.mxu0
    %vm202 = vcmask 523264
    %v204 = vsel %vm202, %v60, 0
    %v207 = vsel %vm202, %v61, 0
    %v210 = vsel %vm202, %v62, 0
    %v213 = vsel %vm202, %v63, 0
    %v216 = vsel %vm202, %v64, 0
    %v219 = vsel %vm202, %v65, 0
    %v222 = vsel %vm202, %v66, 0
    %v225 = vsel %vm202, %v67, 0
    %227 = vmatprep.subr.mxu0 0.0
    %228 = vmatpush1.msra.mxu0 %v164
    %229 = vmatprep.subr.mxu0 0.0
    %230 = vmatpush1.msra.mxu0 %v169
    %231 = vmatprep.subr.mxu0 0.0
    %232 = vmatpush1.msra.mxu0 %v174
    %233 = vmatprep.subr.mxu0 0.0
    %234 = vmatpush1.msra.mxu0 %v179
    %235 = vmatprep.subr.mxu0 0.0
    %236 = vmatpush1.msra.mxu0 %v184
    %237 = vmatprep.subr.mxu0 0.0
    %238 = vmatpush1.msra.mxu0 %v189
    %239 = vmatprep.subr.mxu0 0.0
    %240 = vmatpush1.msra.mxu0 %v194
    %241 = vmatprep.subr.mxu0 0.0
    %242 = vmatpush1.msra.mxu0 %v199
    %243 = vmatprep.subr.mxu0 0.0
    %244 = vmatpush1.msra.mxu0 0.0
    %245 = vmatprep.subr.mxu0 0.0
    %246 = vmatpush1.msra.mxu0 0.0
    %247 = vmatprep.subr.mxu0 0.0
    %248 = vmatpush1.msra.mxu0 0.0
    %249 = vmatprep.subr.mxu0 0.0
    %250 = vmatpush1.msra.mxu0 0.0
    %251 = vmatprep.subr.mxu0 0.0
    %252 = vmatpush1.msra.mxu0 0.0
    %253 = vmatprep.subr.mxu0 0.0
    %254 = vmatpush1.msra.mxu0 0.0
    %255 = vmatprep.subr.mxu0 0.0
    %256 = vmatpush1.msra.mxu0 0.0
    %257 = vmatprep.subr.mxu0 0.0
    %258 = vmatpush1.msra.mxu0 0.0
    %259 = vmatprep.subr.mxu0 0.0
    %260 = vmatpush1.msra.mxu0 0.0
    %261 = vmatprep.subr.mxu0 0.0
    %262 = vmatpush1.msra.mxu0 0.0
    %263 = vmatprep.subr.mxu0 0.0
    %264 = vmatpush1.msra.mxu0 0.0
    %265 = vmatprep.subr.mxu0 0.0
    %266 = vmatpush1.msra.mxu0 0.0
    %267 = vmatprep.subr.mxu0 0.0
    %268 = vmatpush1.msra.mxu0 0.0
    %269 = vmatprep.subr.mxu0 0.0
    %270 = vmatpush1.msra.mxu0 0.0
    %271 = vmatprep.subr.mxu0 0.0
    %272 = vmatpush1.msra.mxu0 0.0
    %273 = vmatprep.subr.mxu0 0.0
    %274 = vmatpush1.msra.mxu0 0.0
    %275 = vmatprep.subr.mxu0 0.0
    %276 = vmatpush1.msra.mxu0 0.0
    %277 = vmatprep.subr.mxu0 0.0
    %278 = vmatpush1.msra.mxu0 0.0
    %279 = vmatprep.subr.mxu0 0.0
    %280 = vmatpush1.msra.mxu0 0.0
    %281 = vmatprep.subr.mxu0 0.0
    %282 = vmatpush1.msra.mxu0 0.0
    %283 = vmatprep.subr.mxu0 0.0
    %284 = vmatpush1.msra.mxu0 0.0
    %285 = vmatprep.subr.mxu0 0.0
    %286 = vmatpush1.msra.mxu0 0.0
    %287 = vmatprep.subr.mxu0 0.0
    %288 = vmatpush1.msra.mxu0 0.0
    %289 = vmatprep.subr.mxu0 0.0
    %290 = vmatpush1.msra.mxu0 0.0
    %291 = vmatprep.mubr.f32.mxu0 0.0
    %292 = vmatmul.mubr.f32.gmra.mrb[0].mxu0 %v204
    %v293 = vpop.f32.mrb[0].mxu0
    %v294 = vadd.f32 0.0, %v293
    %v295 = vpop.f32.mrb[0].mxu0
    %296 = vmatprep.mubr.f32.mxu0 0.0
    %297 = vmatmul.mubr.f32.gmra.mrb[0].mxu0 %v207
    %v298 = vpop.f32.mrb[0].mxu0
    %v299 = vadd.f32 0.0, %v298
    %v300 = vpop.f32.mrb[0].mxu0
    %301 = vmatprep.mubr.f32.mxu0 0.0
    %302 = vmatmul.mubr.f32.gmra.mrb[0].mxu0 %v210
    %v303 = vpop.f32.mrb[0].mxu0
    %v304 = vadd.f32 0.0, %v303
    %v305 = vpop.f32.mrb[0].mxu0
    %306 = vmatprep.mubr.f32.mxu0 0.0
    %307 = vmatmul.mubr.f32.gmra.mrb[0].mxu0 %v213
    %v308 = vpop.f32.mrb[0].mxu0
    %v309 = vadd.f32 0.0, %v308
    %v310 = vpop.f32.mrb[0].mxu0
    %311 = vmatprep.mubr.f32.mxu0 0.0
    %312 = vmatmul.mubr.f32.gmra.mrb[0].mxu0 %v216
    %v313 = vpop.f32.mrb[0].mxu0
    %v314 = vadd.f32 0.0, %v313
    %v315 = vpop.f32.mrb[0].mxu0
    %316 = vmatprep.mubr.f32.mxu0 0.0
    %317 = vmatmul.mubr.f32.gmra.mrb[0].mxu0 %v219
    %v318 = vpop.f32.mrb[0].mxu0
    %v319 = vadd.f32 0.0, %v318
    %v320 = vpop.f32.mrb[0].mxu0
    %321 = vmatprep.mubr.f32.mxu0 0.0
    %322 = vmatmul.mubr.f32.gmra.mrb[0].mxu0 %v222
    %v323 = vpop.f32.mrb[0].mxu0
    %v324 = vadd.f32 0.0, %v323
    %v325 = vpop.f32.mrb[0].mxu0
    %326 = vmatprep.mubr.f32.mxu0 0.0
    %327 = vmatmul.mubr.f32.gmra.mrb[0].mxu0 %v225
    %v328 = vpop.f32.mrb[0].mxu0
    %v329 = vadd.f32 0.0, %v328
    %v330 = vpop.f32.mrb[0].mxu0
    %331 = vdwg.mxu0
    %v332 = vmax.f32 %v294, 0.0
    %v333 = vmax.f32 %v299, 0.0
    %v334 = vmax.f32 %v304, 0.0
    %v335 = vmax.f32 %v309, 0.0
    %v336 = vmax.f32 %v314, 0.0
    %v337 = vmax.f32 %v319, 0.0
    %v338 = vmax.f32 %v324, 0.0
    %v339 = vmax.f32 %v329, 0.0
    %v340 = vld [vmem:[#allocation2] sm:$0xff]
    %v341 = vld [vmem:[#allocation2 + $0x8] sm:$0xff]
    %v342 = vld [vmem:[#allocation2 + $0x10] sm:$0xff]
    %v343 = vld [vmem:[#allocation2 + $0x18] sm:$0xff]
    %v345 = vsel %vm72, %v332, 0
    %v348 = vsel %vm72, %v333, 0
    %v351 = vsel %vm72, %v334, 0
    %v354 = vsel %vm72, %v335, 0
    %v357 = vsel %vm72, %v336, 0
    %v360 = vsel %vm72, %v337, 0
    %v363 = vsel %vm72, %v338, 0
    %v366 = vsel %vm72, %v339, 0
    %368 = vmatprep.subr.mxu0 0.0
    %369 = vmatpush1.msra.mxu0 %v340
    %370 = vmatprep.subr.mxu0 0.0
    %371 = vmatpush1.msra.mxu0 %v341
    %372 = vmatprep.subr.mxu0 0.0
    %373 = vmatpush1.msra.mxu0 %v342
    %374 = vmatprep.subr.mxu0 0.0
    %375 = vmatpush1.msra.mxu0 %v343
    %376 = vmatprep.subr.mxu0 0.0
    %377 = vmatpush1.msra.mxu0 0.0
    %378 = vmatprep.subr.mxu0 0.0
    %379 = vmatpush1.msra.mxu0 0.0
    %380 = vmatprep.subr.mxu0 0.0
    %381 = vmatpush1.msra.mxu0 0.0
    %382 = vmatprep.subr.mxu0 0.0
    %383 = vmatpush1.msra.mxu0 0.0
    %384 = vmatprep.subr.mxu0 0.0
    %385 = vmatpush1.msra.mxu0 0.0
    %386 = vmatprep.subr.mxu0 0.0
    %387 = vmatpush1.msra.mxu0 0.0
    %388 = vmatprep.subr.mxu0 0.0
    %389 = vmatpush1.msra.mxu0 0.0
    %390 = vmatprep.subr.mxu0 0.0
    %391 = vmatpush1.msra.mxu0 0.0
    %392 = vmatprep.subr.mxu0 0.0
    %393 = vmatpush1.msra.mxu0 0.0
    %394 = vmatprep.subr.mxu0 0.0
    %395 = vmatpush1.msra.mxu0 0.0
    %396 = vmatprep.subr.mxu0 0.0
    %397 = vmatpush1.msra.mxu0 0.0
    %398 = vmatprep.subr.mxu0 0.0
    %399 = vmatpush1.msra.mxu0 0.0
    %400 = vmatprep.subr.mxu0 0.0
    %401 = vmatpush1.msra.mxu0 0.0
    %402 = vmatprep.subr.mxu0 0.0
    %403 = vmatpush1.msra.mxu0 0.0
    %404 = vmatprep.subr.mxu0 0.0
    %405 = vmatpush1.msra.mxu0 0.0
    %406 = vmatprep.subr.mxu0 0.0
    %407 = vmatpush1.msra.mxu0 0.0
    %408 = vmatprep.subr.mxu0 0.0
    %409 = vmatpush1.msra.mxu0 0.0
    %410 = vmatprep.subr.mxu0 0.0
    %411 = vmatpush1.msra.mxu0 0.0
    %412 = vmatprep.subr.mxu0 0.0
    %413 = vmatpush1.msra.mxu0 0.0
    %414 = vmatprep.subr.mxu0 0.0
    %415 = vmatpush1.msra.mxu0 0.0
    %416 = vmatprep.subr.mxu0 0.0
    %417 = vmatpush1.msra.mxu0 0.0
    %418 = vmatprep.subr.mxu0 0.0
    %419 = vmatpush1.msra.mxu0 0.0
    %420 = vmatprep.subr.mxu0 0.0
    %421 = vmatpush1.msra.mxu0 0.0
    %422 = vmatprep.subr.mxu0 0.0
    %423 = vmatpush1.msra.mxu0 0.0
    %424 = vmatprep.subr.mxu0 0.0
    %425 = vmatpush1.msra.mxu0 0.0
    %426 = vmatprep.subr.mxu0 0.0
    %427 = vmatpush1.msra.mxu0 0.0
    %428 = vmatprep.subr.mxu0 0.0
    %429 = vmatpush1.msra.mxu0 0.0
    %430 = vmatprep.subr.mxu0 0.0
    %431 = vmatpush1.msra.mxu0 0.0
    %432 = vmatprep.mubr.f32.mxu0 0.0
    %433 = vmatmul.mubr.f32.gmra.mrb[0].mxu0 %v345
    %v434 = vpop.f32.mrb[0].mxu0
    %v435 = vadd.f32 0.0, %v434
    %v436 = vpop.f32.mrb[0].mxu0
    %437 = vmatprep.mubr.f32.mxu0 0.0
    %438 = vmatmul.mubr.f32.gmra.mrb[0].mxu0 %v348
    %v439 = vpop.f32.mrb[0].mxu0
    %v440 = vadd.f32 0.0, %v439
    %v441 = vpop.f32.mrb[0].mxu0
    %442 = vmatprep.mubr.f32.mxu0 0.0
    %443 = vmatmul.mubr.f32.gmra.mrb[0].mxu0 %v351
    %v444 = vpop.f32.mrb[0].mxu0
    %v445 = vadd.f32 0.0, %v444
    %v446 = vpop.f32.mrb[0].mxu0
    %447 = vmatprep.mubr.f32.mxu0 0.0
    %448 = vmatmul.mubr.f32.gmra.mrb[0].mxu0 %v354
    %v449 = vpop.f32.mrb[0].mxu0
    %v450 = vadd.f32 0.0, %v449
    %v451 = vpop.f32.mrb[0].mxu0
    %452 = vmatprep.mubr.f32.mxu0 0.0
    %453 = vmatmul.mubr.f32.gmra.mrb[0].mxu0 %v357
    %v454 = vpop.f32.mrb[0].mxu0
    %v455 = vadd.f32 0.0, %v454
    %v456 = vpop.f32.mrb[0].mxu0
    %457 = vmatprep.mubr.f32.mxu0 0.0
    %458 = vmatmul.mubr.f32.gmra.mrb[0].mxu0 %v360
    %v459 = vpop.f32.mrb[0].mxu0
    %v460 = vadd.f32 0.0, %v459
    %v461 = vpop.f32.mrb[0].mxu0
    %462 = vmatprep.mubr.f32.mxu0 0.0
    %463 = vmatmul.mubr.f32.gmra.mrb[0].mxu0 %v363
    %v464 = vpop.f32.mrb[0].mxu0
    %v465 = vadd.f32 0.0, %v464
    %v466 = vpop.f32.mrb[0].mxu0
    %467 = vmatprep.mubr.f32.mxu0 0.0
    %468 = vmatmul.mubr.f32.gmra.mrb[0].mxu0 %v366
    %v469 = vpop.f32.mrb[0].mxu0
    %v470 = vadd.f32 0.0, %v469
    %v471 = vpop.f32.mrb[0].mxu0
    %472 = vdwg.mxu0
    %473 = vmatprep.subr.mxu0 0.0
    %474 = vmatpush1.msra.mxu0 %v435
    %475 = vmatprep.subr.mxu0 0.0
    %476 = vmatpush1.msra.mxu0 %v440
    %477 = vmatprep.subr.mxu0 0.0
    %478 = vmatpush1.msra.mxu0 %v445
    %479 = vmatprep.subr.mxu0 0.0
    %480 = vmatpush1.msra.mxu0 %v450
    %481 = vmatprep.subr.mxu0 0.0
    %482 = vmatpush1.msra.mxu0 %v455
    %483 = vmatprep.subr.mxu0 0.0
    %484 = vmatpush1.msra.mxu0 %v460
    %485 = vmatprep.subr.mxu0 0.0
    %486 = vmatpush1.msra.mxu0 %v465
    %487 = vmatprep.subr.mxu0 0.0
    %488 = vmatpush1.msra.mxu0 %v470
    %489 = vmatprep.subr.mxu0 0.0
    %490 = vmatpush1.msra.mxu0 0.0
    %491 = vmatprep.subr.mxu0 0.0
    %492 = vmatpush1.msra.mxu0 0.0
    %493 = vmatprep.subr.mxu0 0.0
    %494 = vmatpush1.msra.mxu0 0.0
    %495 = vmatprep.subr.mxu0 0.0
    %496 = vmatpush1.msra.mxu0 0.0
    %497 = vmatprep.subr.mxu0 0.0
    %498 = vmatpush1.msra.mxu0 0.0
    %499 = vmatprep.subr.mxu0 0.0
    %500 = vmatpush1.msra.mxu0 0.0
    %501 = vmatprep.subr.mxu0 0.0
    %502 = vmatpush1.msra.mxu0 0.0
    %503 = vmatprep.subr.mxu0 0.0
    %504 = vmatpush1.msra.mxu0 0.0
    %505 = vmatprep.subr.mxu0 0.0
    %506 = vmatpush1.msra.mxu0 0.0
    %507 = vmatprep.subr.mxu0 0.0
    %508 = vmatpush1.msra.mxu0 0.0
    %509 = vmatprep.subr.mxu0 0.0
    %510 = vmatpush1.msra.mxu0 0.0
    %511 = vmatprep.subr.mxu0 0.0
    %512 = vmatpush1.msra.mxu0 0.0
    %513 = vmatprep.subr.mxu0 0.0
    %514 = vmatpush1.msra.mxu0 0.0
    %515 = vmatprep.subr.mxu0 0.0
    %516 = vmatpush1.msra.mxu0 0.0
    %517 = vmatprep.subr.mxu0 0.0
    %518 = vmatpush1.msra.mxu0 0.0
    %519 = vmatprep.subr.mxu0 0.0
    %520 = vmatpush1.msra.mxu0 0.0
    %521 = vmatprep.subr.mxu0 0.0
    %522 = vmatpush1.msra.mxu0 0.0
    %523 = vmatprep.subr.mxu0 0.0
    %524 = vmatpush1.msra.mxu0 0.0
    %525 = vmatprep.subr.mxu0 0.0
    %526 = vmatpush1.msra.mxu0 0.0
    %527 = vmatprep.subr.mxu0 0.0
    %528 = vmatpush1.msra.mxu0 0.0
    %529 = vmatprep.subr.mxu0 0.0
    %530 = vmatpush1.msra.mxu0 0.0
    %531 = vmatprep.subr.mxu0 0.0
    %532 = vmatpush1.msra.mxu0 0.0
    %533 = vmatprep.subr.mxu0 0.0
    %534 = vmatpush1.msra.mxu0 0.0
    %535 = vmatprep.subr.mxu0 0.0
    %536 = vmatpush1.msra.mxu0 0.0
    %537 = vmatprep.mubr.f32.mxu0 0.0
    %538 = vmatmul.mubr.f32.gmra.mrb[0].mxu0 %v204
    %v539 = vpop.f32.mrb[0].mxu0
    %v540 = vadd.f32 0.0, %v539
    %v541 = vpop.f32.mrb[0].mxu0
    %542 = vmatprep.mubr.f32.mxu0 0.0
    %543 = vmatmul.mubr.f32.gmra.mrb[0].mxu0 %v207
    %v544 = vpop.f32.mrb[0].mxu0
    %v545 = vadd.f32 0.0, %v544
    %v546 = vpop.f32.mrb[0].mxu0
    %547 = vmatprep.mubr.f32.mxu0 0.0
    %548 = vmatmul.mubr.f32.gmra.mrb[0].mxu0 %v210
    %v549 = vpop.f32.mrb[0].mxu0
    %v550 = vadd.f32 0.0, %v549
    %v551 = vpop.f32.mrb[0].mxu0
    %552 = vmatprep.mubr.f32.mxu0 0.0
    %553 = vmatmul.mubr.f32.gmra.mrb[0].mxu0 %v213
    %v554 = vpop.f32.mrb[0].mxu0
    %v555 = vadd.f32 0.0, %v554
    %v556 = vpop.f32.mrb[0].mxu0
    %557 = vmatprep.mubr.f32.mxu0 0.0
    %558 = vmatmul.mubr.f32.gmra.mrb[0].mxu0 %v216
    %v559 = vpop.f32.mrb[0].mxu0
    %v560 = vadd.f32 0.0, %v559
    %v561 = vpop.f32.mrb[0].mxu0
    %562 = vmatprep.mubr.f32.mxu0 0.0
    %563 = vmatmul.mubr.f32.gmra.mrb[0].mxu0 %v219
    %v564 = vpop.f32.mrb[0].mxu0
    %v565 = vadd.f32 0.0, %v564
    %v566 = vpop.f32.mrb[0].mxu0
    %567 = vmatprep.mubr.f32.mxu0 0.0
    %568 = vmatmul.mubr.f32.gmra.mrb[0].mxu0 %v222
    %v569 = vpop.f32.mrb[0].mxu0
    %v570 = vadd.f32 0.0, %v569
    %v571 = vpop.f32.mrb[0].mxu0
    %572 = vmatprep.mubr.f32.mxu0 0.0
    %573 = vmatmul.mubr.f32.gmra.mrb[0].mxu0 %v225
    %v574 = vpop.f32.mrb[0].mxu0
    %v575 = vadd.f32 0.0, %v574
    %v576 = vpop.f32.mrb[0].mxu0
    %577 = vdwg.mxu0
    %578 = vst [vmem:[#allocation7] sm:$0xff] %v540
    %579 = vst [vmem:[#allocation7 + $0x8] sm:$0xff] %v545
    %580 = vst [vmem:[#allocation7 + $0x10] sm:$0xff] %v550
    %581 = vst [vmem:[#allocation7 + $0x18] sm:$0xff] %v555
    %582 = vst [vmem:[#allocation7 + $0x20] sm:$0xff] %v560
    %583 = vst [vmem:[#allocation7 + $0x28] sm:$0xff] %v565
    %584 = vst [vmem:[#allocation7 + $0x30] sm:$0xff] %v570
    %585 = vst [vmem:[#allocation7 + $0x38] sm:$0xff] %v575
    %v586 = vlaneseq
    %v587 = vand.u32 %v586, 127
    %vm588 = vcmp.eq.s32.totalorder %v587, 16
    %v589 = vsel %vm588, %v540, 0.0
    %v590 = vsel %vm588, %v545, 0.0
    %v591 = vsel %vm588, %v550, 0.0
    %v592 = vsel %vm588, %v555, 0.0
    %v593 = vsel %vm588, %v560, 0.0
    %v594 = vsel %vm588, %v565, 0.0
    %v595 = vsel %vm588, %v570, 0.0
    %v596 = vsel %vm588, %v575, 0.0
    %597 = vadd.xlane.f32.xlu0 %v589
    %v598 = vpop.xlane.xlu0 %597
    %599 = vadd.xlane.f32.xlu0 %v590
    %v600 = vpop.xlane.xlu0 %599
    %601 = vadd.xlane.f32.xlu0 %v591
    %v602 = vpop.xlane.xlu0 %601
    %603 = vadd.xlane.f32.xlu0 %v592
    %v604 = vpop.xlane.xlu0 %603
    %605 = vadd.xlane.f32.xlu0 %v593
    %v606 = vpop.xlane.xlu0 %605
    %607 = vadd.xlane.f32.xlu0 %v594
    %v608 = vpop.xlane.xlu0 %607
    %609 = vadd.xlane.f32.xlu0 %v595
    %v610 = vpop.xlane.xlu0 %609
    %611 = vadd.xlane.f32.xlu0 %v596
    %v612 = vpop.xlane.xlu0 %611
    %v613 = vmul.f32 %v598, 0.5
    %v614 = vmul.f32 %v600, 0.5
    %v615 = vmul.f32 %v602, 0.5
    %v616 = vmul.f32 %v604, 0.5
    %v617 = vmul.f32 %v606, 0.5
    %v618 = vmul.f32 %v608, 0.5
    %v619 = vmul.f32 %v610, 0.5
    %v620 = vmul.f32 %v612, 0.5
    %v621 = vmul.f32 %v613, 1.442695
    %v622 = vpow.pop %v621
    %v623 = vmul.f32 %v614, 1.442695
    %v624 = vpow.pop %v623
    %v625 = vmul.f32 %v615, 1.442695
    %v626 = vpow.pop %v625
    %v627 = vmul.f32 %v616, 1.442695
    %v628 = vpow.pop %v627
    %v629 = vmul.f32 %v617, 1.442695
    %v630 = vpow.pop %v629
    %v631 = vmul.f32 %v618, 1.442695
    %v632 = vpow.pop %v631
    %v633 = vmul.f32 %v619, 1.442695
    %v634 = vpow.pop %v633
    %v635 = vmul.f32 %v620, 1.442695
    %v636 = vpow.pop %v635
    %v637 = vld [vmem:[#allocation5] sm:$0xff]
    %v638 = vld [vmem:[#allocation5 + $0x8] sm:$0xff]
    %v639 = vld [vmem:[#allocation5 + $0x10] sm:$0xff]
    %v640 = vld [vmem:[#allocation5 + $0x18] sm:$0xff]
    %v641 = vld [vmem:[#allocation5 + $0x20] sm:$0xff]
    %v642 = vld [vmem:[#allocation5 + $0x28] sm:$0xff]
    %v643 = vld [vmem:[#allocation5 + $0x30] sm:$0xff]
    %v644 = vld [vmem:[#allocation5 + $0x38] sm:$0xff]
    %v645 = vmul.f32 %v637, %v622
    %v646 = vmul.f32 %v638, %v624
    %v647 = vmul.f32 %v639, %v626
    %v648 = vmul.f32 %v640, %v628
    %v649 = vmul.f32 %v641, %v630
    %v650 = vmul.f32 %v642, %v632
    %v651 = vmul.f32 %v643, %v634
    %v652 = vmul.f32 %v644, %v636
    %v653 = vadd.f32 %v645, %v540
    %v654 = vadd.f32 %v646, %v545
    %v655 = vadd.f32 %v647, %v550
    %v656 = vadd.f32 %v648, %v555
    %v657 = vadd.f32 %v649, %v560
    %v658 = vadd.f32 %v650, %v565
    %v659 = vadd.f32 %v651, %v570
    %v660 = vadd.f32 %v652, %v575
    %661 = vst [vmem:[#allocation8] sm:$0xff] %v653
    %662 = vst [vmem:[#allocation8 + $0x8] sm:$0xff] %v654
    %663 = vst [vmem:[#allocation8 + $0x10] sm:$0xff] %v655
    %664 = vst [vmem:[#allocation8 + $0x18] sm:$0xff] %v656
    %665 = vst [vmem:[#allocation8 + $0x20] sm:$0xff] %v657
    %666 = vst [vmem:[#allocation8 + $0x28] sm:$0xff] %v658
    %667 = vst [vmem:[#allocation8 + $0x30] sm:$0xff] %v659
    %668 = vst [vmem:[#allocation8 + $0x38] sm:$0xff] %v660
    // Predicated region
    $region30: #{tpu_custom_call.1} parent=1 // pred_check
      _
    $region31: #{tpu_custom_call.1} parent=1 // pred_check_branch
      %670 = sbr.rel (0) target = $region33
    $region32: #{tpu_custom_call.1} parent=1 // pred_region
      %s672 = ssub.s32 1024, 1024
      %673 = vsyncadd [#allocation4], %s672
      %s674 = sshll.u32 [#allocation7], 4
      %s675 = int_to_ptr.vmem [resolvable:$true] %s674
      %680 = dma.vmem_to_hbm [thread:$0]  %s675, 1024, %s5, [#allocation4], 128, 128, 8
    $region33: #{tpu_custom_call.1} parent=1 // pred_fallthru
      _
    // Predicated region
    $region34: #{tpu_custom_call.1} parent=1 // pred_check
      _
    $region35: #{tpu_custom_call.1} parent=1 // pred_check_branch
      %682 = sbr.rel (0) target = $region37
    $region36: #{tpu_custom_call.1} parent=1 // pred_region
      %s684 = ssub.s32 1024, 1024
      %685 = vsyncadd [#allocation9], %s684
      %s686 = sshll.u32 [#allocation8], 4
      %s687 = int_to_ptr.vmem [resolvable:$true] %s686
      %692 = dma.vmem_to_hbm [thread:$0]  %s687, 1024, %s6, [#allocation9], 128, 128, 8
    $region37: #{tpu_custom_call.1} parent=1 // pred_fallthru
      _
    // Predicated region
    $region38: #{tpu_custom_call.1} parent=1 // pred_check
      _
    $region39: #{tpu_custom_call.1} parent=1 // pred_check_branch
      %694 = sbr.rel (0) target = $region41
    $region40: #{tpu_custom_call.1} parent=1 // pred_region
      %695 = dma.done [#allocation4], 1024
    $region41: #{tpu_custom_call.1} parent=1 // pred_fallthru
      _
    // Predicated region
    $region42: #{tpu_custom_call.1} parent=1 // pred_check
      _
    $region43: #{tpu_custom_call.1} parent=1 // pred_check_branch
      %697 = sbr.rel (0) target = $region45
    $region44: #{tpu_custom_call.1} parent=1 // pred_region
      %698 = dma.done [#allocation9], 1024
    $region45: #{tpu_custom_call.1} parent=1 // pred_fallthru
      _
    %699 = vsyncpa [#allocation3], 1
    %700 = vsyncpa [#allocation6], 1
    %701 = vsyncpa [#allocation4], 1
    %702 = vsyncpa [#allocation9], 1

</llo_original>
